<compile_context>
chip_gen: v6e
topology: v6e:2x2x1
jax: 0.10.0
libtpu: 0.0.40
codegen_flags: <defaults>
</compile_context>

<pallas_src>
import functools

import jax
import jax.numpy as jnp
from jax.experimental import pallas as pl
from jax.experimental.pallas import tpu as pltpu


def gtu_kernel(x_ref, w_ref, b_ref, o_ref, *, p_cols):
    # x_ref: (tm, C*T) bf16   w_ref: (C*T, 2*P) bf16   b_ref: (1, 2*P) f32
    # o_ref: (tm, P)  -- lane-dense (P % 128 == 0), pad columns evaluate to 0.
    acc = jnp.dot(x_ref[...], w_ref[...], preferred_element_type=jnp.float32)
    acc = acc + b_ref[...]
    p = acc[:, :p_cols]            # tanh half    (128-aligned slice)
    q = acc[:, p_cols:]            # sigmoid half (128-aligned slice)
    # sigmoid(q) == 0.5 * (1 + tanh(0.5 * q)) -> 2 tanh EUP pushes, no exp/recip.
    o_ref[...] = (jnp.tanh(p) * (0.5 * (jnp.tanh(0.5 * q) + 1.0))).astype(o_ref.dtype)


def _round_up(x, m):
    return ((x + m - 1) // m) * m


def _chip_config():
    """(num_tensorcores_per_chip, vmem budget in bytes) — best-effort detection."""
    kind = ""
    try:
        kind = jax.devices()[0].device_kind.lower()
    except Exception:  # pragma: no cover - defensive
        pass
    two_tc = any(tag in kind for tag in ("v4", "v5p", "v7", "7x"))
    small_vmem = ("v7" in kind) or ("7x" in kind)     # v7x: 64 MiB physical per TC
    vmem_budget = (40 if small_vmem else 96) * 1024 * 1024
    return (2 if two_tc else 1), vmem_budget


def _pick_tm(m_rows, ct, p_cols, out_itemsize, vmem_budget, num_cores):
    """Largest tm (multiple of 16, <=1024) whose double-buffered blocks fit VMEM."""
    headroom = 4 << 20
    # Grid-invariant inputs (weight + bias), conservatively counted double-buffered.
    fixed = 2 * (ct * (2 * p_cols) * 2 + (2 * p_cols) * 4)
    # Per-row bytes: bf16 x block + output block, double-buffered.
    per_row = 2 * (ct * 2 + p_cols * out_itemsize)
    tm = 1024
    while tm > 16 and fixed + tm * per_row + headroom > vmem_budget:
        tm -= 16
    tm = min(tm, _round_up(m_rows, 16))
    if num_cores > 1:
        # Prefer >= num_cores grid steps, but only if each step keeps >= 256 rows.
        per_core = _round_up(pl.cdiv(m_rows, num_cores), 16)
        if per_core >= 256:
            tm = min(tm, per_core)
    tm = max(tm, 16)
    need = fixed + tm * per_row + headroom
    return tm, need


def _build_expanded_weights(weight, bias, T, stride):
    """Expand the (2C, C, 1, K) conv weight into a (C*T, 2*P) matmul weight.

    Column layout: [ p-half (C*T_out cols, zero-padded to P) |
                     q-half (C*T_out cols, zero-padded to P) ],
    column index oc * T_out + t_out inside each half; row index c * T + t_in.
    Pad columns (weight AND bias) are exactly zero, so the kernel's extra output
    columns are tanh(0)*sigmoid(0) == 0 and can simply be sliced off.
    """
    two_c, C, _, K = weight.shape
    T_out = (T - K) // stride + 1
    ct_out = C * T_out
    P = _round_up(ct_out, 128)
    pad = P - ct_out

    w = weight[:, :, 0, :].astype(jnp.float32)                       # (2C, C, K)
    tin = jnp.arange(T)[:, None, None]                               # (T, 1, 1)
    tout = jnp.arange(T_out)[None, :, None]                          # (1, T_out, 1)
    taps = jnp.arange(K)[None, None, :]                              # (1, 1, K)
    sel = (tin == tout * stride + taps).astype(jnp.float32)          # (T, T_out, K)
    # W4[c, t_in, och, t_out] = sum_k w[och, c, k] * sel[t_in, t_out, k]
    W4 = jnp.einsum("ock,ytk->cyot", w, sel)                         # (C, T, 2C, T_out)
    W4 = W4.reshape(C * T, 2 * C, T_out)

    Wp = jnp.pad(W4[:, :C, :].reshape(C * T, ct_out), ((0, 0), (0, pad)))
    Wq = jnp.pad(W4[:, C:, :].reshape(C * T, ct_out), ((0, 0), (0, pad)))
    W2 = jnp.concatenate([Wp, Wq], axis=1)                           # (C*T, 2P)

    b = bias.astype(jnp.float32)
    bp = jnp.pad(jnp.repeat(b[:C], T_out), (0, pad))
    bq = jnp.pad(jnp.repeat(b[C:], T_out), (0, pad))
    b2 = jnp.concatenate([bp, bq]).reshape(1, 2 * P)
    return W2, b2, T_out, P


def gtu_forward(x_nchw, weight, bias, time_strides):
    """x_nchw: (B, C, N, T); weight: (2C, C, 1, K); bias: (2C,)."""
    B, C, N, T = x_nchw.shape
    W2, b2, T_out, P = _build_expanded_weights(weight, bias, T, time_strides)
    CT = C * T
    ct_out = C * T_out
    M = B * N
    out_dtype = x_nchw.dtype
    out_itemsize = jnp.dtype(out_dtype).itemsize

    # NCHW -> rows of (b, n) with per-row features flattened channel-major:
    #   x2d[b*N + n, c*T + t] = x[b, c, n, t]
    x2d = jnp.transpose(x_nchw, (0, 2, 1, 3)).reshape(M, CT)

    num_cores, vmem_budget = _chip_config()
    tm, vmem_need = _pick_tm(M, CT, P, out_itemsize, vmem_budget, num_cores)

    grid_m = pl.cdiv(M, tm)
    M_pad = grid_m * tm
    if M_pad != M:
        x2d = jnp.pad(x2d, ((0, M_pad - M), (0, 0)))

    # bf16 MXU path; accumulation stays f32 inside the kernel.
    x2d = x2d.astype(jnp.bfloat16)
    W2 = W2.astype(jnp.bfloat16)
    b2 = b2.astype(jnp.float32)

    vmem_limit = int(min(vmem_budget, max(vmem_need, 16 << 20)))

    out2d = pl.pallas_call(
        functools.partial(gtu_kernel, p_cols=P),
        out_shape=jax.ShapeDtypeStruct((M_pad, P), out_dtype),
        grid=(grid_m,),
        in_specs=[
            pl.BlockSpec((tm, CT), lambda i: (i, 0)),
            pl.BlockSpec((CT, 2 * P), lambda i: (0, 0)),   # grid-invariant weight
            pl.BlockSpec((1, 2 * P), lambda i: (0, 0)),    # grid-invariant bias
        ],
        out_specs=pl.BlockSpec((tm, P), lambda i: (i, 0)),  # lane-dense (P % 128 == 0)
        compiler_params=pltpu.CompilerParams(
            dimension_semantics=("parallel",),
            vmem_limit_bytes=vmem_limit,
        ),
    )(x2d, W2, b2)

    # (M_pad, P) -> (M, C*T_out) -> (B, C, N, T_out)
    out = out2d[:M, :ct_out].reshape(B, N, C, T_out)
    return jnp.transpose(out, (0, 2, 1, 3))


def gtu_reference(x_nchw, weight, bias, time_strides):
    """Pure-JAX reference matching the PyTorch module."""
    C = x_nchw.shape[1]
    conv = jax.lax.conv_general_dilated(
        x_nchw, weight,
        window_strides=(1, time_strides),
        padding="VALID",
        dimension_numbers=("NCHW", "OIHW", "NCHW"),
    ) + bias[None, :, None, None]
    return jnp.tanh(conv[:, :C]) * jax.nn.sigmoid(conv[:, C:])


if __name__ == "__main__":
    # Small shapes consistent with the module's forward.
    B, C, N, T = 2, 4, 16, 16          # batch, in_channels, num_nodes (H), time (W)
    K, S = 3, 1                        # kernel_size, time_strides

    key = jax.random.PRNGKey(0)
    kx, kw, kb = jax.random.split(key, 3)
    x = jax.random.normal(kx, (B, C, N, T), dtype=jnp.float32)
    # Deterministic synthetic Conv2d params: weight (2C, C, 1, K), bias (2C,)
    weight = 0.1 * jax.random.normal(kw, (2 * C, C, 1, K), dtype=jnp.float32)
    bias = 0.1 * jax.random.normal(kb, (2 * C,), dtype=jnp.float32)

    out = gtu_forward(x, weight, bias, S)
    out = jax.block_until_ready(out)

    ref = gtu_reference(x, weight, bias, S)
    assert out.shape == ref.shape, (out.shape, ref.shape)
    # bf16 matmul path (f32 accumulator) -> loosened tolerance vs the f32 reference.
    assert jnp.allclose(out, ref, atol=2e-2, rtol=2e-2), "mismatch vs reference"

    print("KERNEL_OK")
</pallas_src>

<mosaic_0001>
module attributes {stable_mosaic.version = 11 : i64} {
  func.func @gtu_kernel(%arg0: i32, %arg1: memref<32x64xbf16, #tpu.memory_space<vmem>>, %arg2: memref<64x256xbf16, #tpu.memory_space<vmem>>, %arg3: memref<1x256xf32, #tpu.memory_space<vmem>>, %arg4: memref<32x128xf32, #tpu.memory_space<vmem>>) attributes {dimension_semantics = [#tpu.dimension_semantics<parallel>], iteration_bounds = array<i64: 1>, scalar_prefetch = 0 : i64, scratch_operands = 0 : i64, tpu.core_type = #tpu.core_type<tc>, window_params = [{transform_indices = @transform_0, window_bounds = array<i64: 32, 64>}, {pipeline_mode = #tpu.pipeline_mode<synchronous>, transform_indices = @transform_1, window_bounds = array<i64: 64, 256>}, {pipeline_mode = #tpu.pipeline_mode<synchronous>, transform_indices = @transform_2, window_bounds = array<i64: 1, 256>}, {transform_indices = @transform_3, window_bounds = array<i64: 32, 128>}]} {
    %c0 = arith.constant 0 : index
    %c0_0 = arith.constant 0 : index
    %0 = vector.load %arg1[%c0, %c0_0] : memref<32x64xbf16, #tpu.memory_space<vmem>>, vector<32x64xbf16>
    %c0_1 = arith.constant 0 : index
    %c0_2 = arith.constant 0 : index
    %1 = vector.load %arg2[%c0_1, %c0_2] : memref<64x256xbf16, #tpu.memory_space<vmem>>, vector<64x256xbf16>
    %cst = arith.constant dense<0.000000e+00> : vector<32x256xf32>
    %2 = tpu.matmul %0, %1, %cst {dimension_numbers = #tpu.dot_dimension_numbers<[1], [0], [0], [1], [0, 0, 1, 1], [], []>} : vector<32x64xbf16>, vector<64x256xbf16>, vector<32x256xf32> -> vector<32x256xf32>
    %c0_3 = arith.constant 0 : index
    %c0_4 = arith.constant 0 : index
    %3 = vector.load %arg3[%c0_3, %c0_4] : memref<1x256xf32, #tpu.memory_space<vmem>>, vector<1x256xf32>
    %4 = vector.broadcast %3 : vector<1x256xf32> to vector<32x256xf32>
    %5 = arith.addf %2, %4 : vector<32x256xf32>
    %6 = vector.extract_strided_slice %5 {offsets = [0, 0], sizes = [32, 128], strides = [1, 1]} : vector<32x256xf32> to vector<32x128xf32>
    %7 = vector.extract_strided_slice %5 {offsets = [0, 128], sizes = [32, 128], strides = [1, 1]} : vector<32x256xf32> to vector<32x128xf32>
    %8 = math.tanh %6 : vector<32x128xf32>
    %cst_5 = arith.constant 5.000000e-01 : f32
    %9 = vector.broadcast %cst_5 : f32 to vector<32x128xf32>
    %10 = arith.mulf %9, %7 : vector<32x128xf32>
    %11 = math.tanh %10 : vector<32x128xf32>
    %cst_6 = arith.constant 1.000000e+00 : f32
    %12 = vector.broadcast %cst_6 : f32 to vector<32x128xf32>
    %13 = arith.addf %11, %12 : vector<32x128xf32>
    %cst_7 = arith.constant 5.000000e-01 : f32
    %14 = vector.broadcast %cst_7 : f32 to vector<32x128xf32>
    %15 = arith.mulf %14, %13 : vector<32x128xf32>
    %16 = arith.mulf %8, %15 : vector<32x128xf32>
    %c0_8 = arith.constant 0 : index
    %c0_9 = arith.constant 0 : index
    %17 = vector.load %arg4[%c0_8, %c0_9] : memref<32x128xf32, #tpu.memory_space<vmem>>, vector<32x128xf32>
    tpu.vector_store %arg4[%c0_8, %c0_9], %16 {strides = array<i32>} : memref<32x128xf32, #tpu.memory_space<vmem>>, vector<32x128xf32>,
    return
  }
  func.func @transform_0(%arg0: i32) -> (i32, i32) {
    %c0_i32 = arith.constant 0 : i32
    %c0_i32_0 = arith.constant 0 : i32
    return %arg0, %c0_i32 : i32, i32
  }
  func.func @transform_1(%arg0: i32) -> (i32, i32) {
    %c0_i32 = arith.constant 0 : i32
    %c0_i32_0 = arith.constant 0 : i32
    %c0_i32_1 = arith.constant 0 : i32
    return %c0_i32, %c0_i32_0 : i32, i32
  }
  func.func @transform_2(%arg0: i32) -> (i32, i32) {
    %c0_i32 = arith.constant 0 : i32
    %c0_i32_0 = arith.constant 0 : i32
    %c0_i32_1 = arith.constant 0 : i32
    return %c0_i32, %c0_i32_0 : i32, i32
  }
  func.func @transform_3(%arg0: i32) -> (i32, i32) {
    %c0_i32 = arith.constant 0 : i32
    %c0_i32_0 = arith.constant 0 : i32
    return %arg0, %c0_i32 : i32, i32
  }
}

</mosaic_0001>

<llo_original>
// kernel: tpu_custom_call.1
$region0: #{tpu_custom_call.1}
  #allocation0 [shape = 'u32[]', space=smem, size = 0x4, offset = 0x4, fixed_abs, tag = 'smem constant byte address 0x4 - core index']
  #allocation1 [shape = 'u32[144,128]{1,0:T(1,128)}', space=vmem, size = 0x12000, scoped, tag = 'internal scratch']
  %s0 = inlined_call_operand.hbm [shape: bf16[32,64], index: 0, kind: input, shape index: {}]
  %s1 = inlined_call_operand.hbm [shape: bf16[64,256], index: 1, kind: input, shape index: {}]
  %s2 = inlined_call_operand.vmem [shape: f32[1,256], index: 2, kind: input, shape index: {}]
  %s3 = inlined_call_operand.hbm [shape: f32[32,128], index: 3, kind: output, shape index: {}]
  %s4 = sld [smem:[#allocation0]]
  $region30: #{tpu_custom_call.1} parent=0
    _
  %s6 = ssub.s32 1, %s4
  %s7 = scalar_select 0, %s6, %s4
  $region1: #{tpu_custom_call.1} parent=0
    #allocation2 [shape = 'u8[8192]{0}', space=vmem, size = 0x2000, scoped, tag = 'input window, operand 0, single buffered']
    #allocation3 [shape = 's32[1]{0}', space=sflag, size = 0x4, scoped, tag = 'scoped memory for tpu_custom_call.1']
    #allocation4 [shape = 's32[1]{0}', space=sflag, size = 0x4, scoped, tag = 'scoped memory for tpu_custom_call.1']
    #allocation5 [shape = 'u8[32768]{0}', space=vmem, size = 0x8000, scoped, tag = 'input window, operand 1, single buffered']
    #allocation6 [shape = 's32[1]{0}', space=sflag, size = 0x4, scoped, tag = 'scoped memory for tpu_custom_call.1']
    #allocation7 [shape = 'u8[16384]{0}', space=vmem, size = 0x4000, scoped, tag = 'output window, operand 0, single buffered']
    %8 = vsyncpa [#allocation3], 0
    %9 = vsyncpa [#allocation6], 0
    %10 = vsyncpa [#allocation4], 0
    // Predicated region
    $region2: #{tpu_custom_call.1} parent=1 // pred_check
      _
    $region3: #{tpu_custom_call.1} parent=1 // pred_check_branch
      %12 = sbr.rel (0) target = $region5
    $region4: #{tpu_custom_call.1} parent=1 // pred_region
      %s14 = ssub.s32 256, 256
      %15 = vsyncadd [#allocation3], %s14
      %s16 = sshll.u32 [#allocation2], 4
      %s17 = int_to_ptr.vmem [resolvable:$true] %s16
      %22 = dma.hbm_to_vmem [thread:$0]  %s0, 256, %s17, [#allocation3], 64, 64, 4
    $region5: #{tpu_custom_call.1} parent=1 // pred_fallthru
      _
    // Predicated region
    $region6: #{tpu_custom_call.1} parent=1 // pred_check
      _
    $region7: #{tpu_custom_call.1} parent=1 // pred_check_branch
      %24 = sbr.rel (0) target = $region9
    $region8: #{tpu_custom_call.1} parent=1 // pred_region
      %s26 = ssub.s32 1024, 1024
      %27 = vsyncadd [#allocation6], %s26
      %s28 = sshll.u32 [#allocation5], 4
      %s29 = int_to_ptr.vmem [resolvable:$true] %s28
      %34 = dma.hbm_to_vmem [thread:$0]  %s1, 1024, %s29, [#allocation6], 128, 128, 8
    $region9: #{tpu_custom_call.1} parent=1 // pred_fallthru
      _
    // Predicated region
    $region10: #{tpu_custom_call.1} parent=1 // pred_check
      _
    $region11: #{tpu_custom_call.1} parent=1 // pred_check_branch
      %36 = sbr.rel (0) target = $region13
    $region12: #{tpu_custom_call.1} parent=1 // pred_region
      _
    $region13: #{tpu_custom_call.1} parent=1 // pred_fallthru
      _
    // Predicated region
    $region14: #{tpu_custom_call.1} parent=1 // pred_check
      _
    $region15: #{tpu_custom_call.1} parent=1 // pred_check_branch
      %38 = sbr.rel (0) target = $region17
    $region16: #{tpu_custom_call.1} parent=1 // pred_region
      %39 = dma.done [#allocation3], 256
    $region17: #{tpu_custom_call.1} parent=1 // pred_fallthru
      _
    // Predicated region
    $region18: #{tpu_custom_call.1} parent=1 // pred_check
      _
    $region19: #{tpu_custom_call.1} parent=1 // pred_check_branch
      %41 = sbr.rel (0) target = $region21
    $region20: #{tpu_custom_call.1} parent=1 // pred_region
      %42 = dma.done [#allocation6], 1024
    $region21: #{tpu_custom_call.1} parent=1 // pred_fallthru
      _
    %v44 = vld [vmem:[#allocation2] sm:$0xf]
    %v45 = vld [vmem:[#allocation2 + $0x4] sm:$0xf]
    %v46 = vld [vmem:[#allocation2 + $0x8] sm:$0xf]
    %v47 = vld [vmem:[#allocation2 + $0xc] sm:$0xf]
    %v48 = vld [vmem:[#allocation5] sm:$0xff]
    %v49 = vld [vmem:[#allocation5 + $0x8] sm:$0xff]
    %v50 = vld [vmem:[#allocation5 + $0x10] sm:$0xff]
    %v51 = vld [vmem:[#allocation5 + $0x18] sm:$0xff]
    %v52 = vld [vmem:[#allocation5 + $0x20] sm:$0xff]
    %v53 = vld [vmem:[#allocation5 + $0x28] sm:$0xff]
    %v54 = vld [vmem:[#allocation5 + $0x30] sm:$0xff]
    %v55 = vld [vmem:[#allocation5 + $0x38] sm:$0xff]
    %v56 = vld [vmem:[%s2] sm:$0x3]
    %v58 = vlaneseq
    %v59 = vshrl.u32 %v58, 7
    %v60 = vsub.s32 0, %v59
    %v61 = vrot.slane %v56, %v60
    %v62 = vlaneseq
    %v63 = vshrl.u32 %v62, 7
    %v64 = vsub.s32 1, %v63
    %v65 = vrot.slane %v56, %v64
    %v72 = vunpack.c.l.b16 %v44
    %v73 = vunpack.c.l.b16 %v45
    %v74 = vunpack.c.l.b16 %v46
    %v75 = vunpack.c.l.b16 %v47
    %v76 = vpack.c.b16 %v73, %v72
    %v77 = vpack.c.b16 %v75, %v74
    %v86 = vunpack.c.l.b16 %v48
    %v87 = vunpack.c.h.b16 %v48
    %v88 = vunpack.c.l.b16 %v49
    %v89 = vunpack.c.h.b16 %v49
    %v90 = vunpack.c.l.b16 %v50
    %v91 = vunpack.c.h.b16 %v50
    %v92 = vunpack.c.l.b16 %v51
    %v93 = vunpack.c.h.b16 %v51
    %v94 = vunpack.c.l.b16 %v52
    %v95 = vunpack.c.h.b16 %v52
    %v96 = vunpack.c.l.b16 %v53
    %v97 = vunpack.c.h.b16 %v53
    %v98 = vunpack.c.l.b16 %v54
    %v99 = vunpack.c.h.b16 %v54
    %v100 = vunpack.c.l.b16 %v55
    %v101 = vunpack.c.h.b16 %v55
    %v102 = vpack.c.b16 %v88, %v86
    %v103 = vpack.c.b16 %v89, %v87
    %v104 = vpack.c.b16 %v92, %v90
    %v105 = vpack.c.b16 %v93, %v91
    %v106 = vpack.c.b16 %v96, %v94
    %v107 = vpack.c.b16 %v97, %v95
    %v108 = vpack.c.b16 %v100, %v98
    %v109 = vpack.c.b16 %v101, %v99
    %vm118 = vcmask 523264
    %v120 = vsel %vm118, %v76, 0
    %v123 = vsel %vm118, %v77, 0
    %125 = vmatprep.subr.bf16.mxu0 0
    %126 = vmatpush1.bf16.msra.mxu0 0
    %127 = vmatprep.subr.bf16.mxu0 0
    %128 = vmatpush1.bf16.msra.mxu0 0
    %129 = vmatprep.subr.bf16.mxu0 0
    %130 = vmatpush1.bf16.msra.mxu0 0
    %131 = vmatprep.subr.bf16.mxu0 0
    %132 = vmatpush1.bf16.msra.mxu0 0
    %133 = vmatprep.subr.bf16.mxu0 %v109
    %134 = vmatpush1.bf16.msra.mxu0 %v108
    %135 = vmatprep.subr.bf16.mxu0 %v107
    %136 = vmatpush1.bf16.msra.mxu0 %v106
    %137 = vmatprep.subr.bf16.mxu0 %v105
    %138 = vmatpush1.bf16.msra.mxu0 %v104
    %139 = vmatprep.subr.bf16.mxu0 %v103
    %140 = vmatpush1.bf16.msra.mxu0 %v102
    %141 = vmatprep.subr.bf16.mxu0 0
    %142 = vmatpush2.bf16.msra.mxu0 0
    %143 = vmatprep.subr.bf16.mxu0 0
    %144 = vmatpush2.bf16.msra.mxu0 0
    %145 = vmatprep.subr.bf16.mxu0 0
    %146 = vmatpush2.bf16.msra.mxu0 0
    %147 = vmatprep.subr.bf16.mxu0 0
    %148 = vmatpush2.bf16.msra.mxu0 0
    %149 = vmatprep.subr.bf16.mxu0 0
    %150 = vmatpush2.bf16.msra.mxu0 0
    %151 = vmatprep.subr.bf16.mxu0 0
    %152 = vmatpush2.bf16.msra.mxu0 0
    %153 = vmatprep.subr.bf16.mxu0 0
    %154 = vmatpush2.bf16.msra.mxu0 0
    %155 = vmatprep.subr.bf16.mxu0 0
    %156 = vmatpush2.bf16.msra.mxu0 0
    %157 = vmatprep.mubr.bf16.mxu0 0
    %158 = vmatmul.mubr.bf16.gmra.mxu0 %v120
    %v159 = vpop.f32.mrf.mxu0
    %v160 = vadd.f32 %v61, %v159
    %v161 = vpop.f32.mrf.mxu0
    %v162 = vadd.f32 %v65, %v161
    %v163 = vpop.f32.mrf.mxu0
    %v164 = vadd.f32 %v61, %v163
    %v165 = vpop.f32.mrf.mxu0
    %v166 = vadd.f32 %v65, %v165
    %167 = vmatprep.mubr.bf16.mxu0 0
    %168 = vmatmul.mubr.bf16.gmra.mxu0 %v123
    %v169 = vpop.f32.mrf.mxu0
    %v170 = vadd.f32 %v61, %v169
    %v171 = vpop.f32.mrf.mxu0
    %v172 = vadd.f32 %v65, %v171
    %v173 = vpop.f32.mrf.mxu0
    %v174 = vadd.f32 %v61, %v173
    %v175 = vpop.f32.mrf.mxu0
    %v176 = vadd.f32 %v65, %v175
    %177 = vdwg.mxu0
    %v178 = vtanh.pop %v160
    %v179 = vtanh.pop %v164
    %v180 = vtanh.pop %v170
    %v181 = vtanh.pop %v174
    %v182 = vmul.f32 %v162, 0.5
    %v183 = vmul.f32 %v166, 0.5
    %v184 = vmul.f32 %v172, 0.5
    %v185 = vmul.f32 %v176, 0.5
    %v186 = vtanh.pop %v182
    %v187 = vtanh.pop %v183
    %v188 = vtanh.pop %v184
    %v189 = vtanh.pop %v185
    %v190 = vadd.f32 %v186, 1.0
    %v191 = vadd.f32 %v187, 1.0
    %v192 = vadd.f32 %v188, 1.0
    %v193 = vadd.f32 %v189, 1.0
    %v194 = vmul.f32 %v190, 0.5
    %v195 = vmul.f32 %v191, 0.5
    %v196 = vmul.f32 %v192, 0.5
    %v197 = vmul.f32 %v193, 0.5
    %v198 = vmul.f32 %v178, %v194
    %v199 = vmul.f32 %v179, %v195
    %v200 = vmul.f32 %v180, %v196
    %v201 = vmul.f32 %v181, %v197
    %202 = vst [vmem:[#allocation7] sm:$0xff] %v198
    %203 = vst [vmem:[#allocation7 + $0x8] sm:$0xff] %v199
    %204 = vst [vmem:[#allocation7 + $0x10] sm:$0xff] %v200
    %205 = vst [vmem:[#allocation7 + $0x18] sm:$0xff] %v201
    // Predicated region
    $region22: #{tpu_custom_call.1} parent=1 // pred_check
      _
    $region23: #{tpu_custom_call.1} parent=1 // pred_check_branch
      %207 = sbr.rel (0) target = $region25
    $region24: #{tpu_custom_call.1} parent=1 // pred_region
      %s209 = ssub.s32 512, 512
      %210 = vsyncadd [#allocation4], %s209
      %s211 = sshll.u32 [#allocation7], 4
      %s212 = int_to_ptr.vmem [resolvable:$true] %s211
      %217 = dma.vmem_to_hbm [thread:$0]  %s212, 512, %s3, [#allocation4], 128, 128, 8
    $region25: #{tpu_custom_call.1} parent=1 // pred_fallthru
      _
    // Predicated region
    $region26: #{tpu_custom_call.1} parent=1 // pred_check
      _
    $region27: #{tpu_custom_call.1} parent=1 // pred_check_branch
      %219 = sbr.rel (0) target = $region29
    $region28: #{tpu_custom_call.1} parent=1 // pred_region
      %220 = dma.done [#allocation4], 512
    $region29: #{tpu_custom_call.1} parent=1 // pred_fallthru
      _
    %221 = vsyncpa [#allocation3], 1
    %222 = vsyncpa [#allocation6], 1
    %223 = vsyncpa [#allocation4], 1

</llo_original>
